<compile_context>
chip_gen: v5e
topology: v5e:2x2
jax: 0.10.0
libtpu: 0.0.40
codegen_flags: <defaults>
</compile_context>

<pallas_src>
import functools

import jax
import jax.numpy as jnp
import numpy as np
from jax import lax
from jax.experimental import pallas as pl
from jax.experimental.pallas import tpu as pltpu

EPS = 1e-5


# --------------------------------------------------------------------------
# Kernels
# --------------------------------------------------------------------------
def _fc_bn_relu_kernel(x_ref, w_ref, g_ref, beta_ref, o_ref, acc_ref=None, *,
                       compute_dtype, k_axis):
    # x_ref: (B, tk)   w_ref: (tk, tn)   g/beta: (1, tn)   o_ref: (B, tn)
    # acc_ref: optional (B, tn) f32 scratch; when None, accumulate in o_ref
    # (valid because o_ref is f32 and its block index ignores k).
    k = pl.program_id(k_axis)
    acc = o_ref if acc_ref is None else acc_ref

    @pl.when(k == 0)
    def _():
        acc[...] = jnp.zeros_like(acc)

    w = w_ref[...]
    if w.dtype != compute_dtype:          # trace-time no-op when pre-packed
        w = w.astype(compute_dtype)
    acc[...] += jnp.dot(x_ref[...].astype(compute_dtype), w,
                        preferred_element_type=jnp.float32)

    @pl.when(k == pl.num_programs(k_axis) - 1)
    def _():
        y = acc[...]
        # NOTE: Linear bias intentionally omitted — training-mode batch-mean
        # subtraction cancels a per-feature additive bias exactly.
        mean = jnp.mean(y, axis=0, keepdims=True)
        d = y - mean                                  # reused below
        var = jnp.mean(d * d, axis=0, keepdims=True)  # biased var (BN training)
        scale = lax.rsqrt(var + EPS) * g_ref[...]     # fold inv-std and gamma
        o_ref[...] = jnp.maximum(d * scale + beta_ref[...], 0.0).astype(o_ref.dtype)


def _fc_relu_kernel(x_ref, w_ref, b_ref, o_ref, acc_ref=None, *,
                    compute_dtype, k_axis):
    # batchNorm=False branch: Linear (+bias) -> ReLU, batch-tiled.
    k = pl.program_id(k_axis)
    acc = o_ref if acc_ref is None else acc_ref

    @pl.when(k == 0)
    def _():
        acc[...] = jnp.zeros_like(acc)

    w = w_ref[...]
    if w.dtype != compute_dtype:
        w = w.astype(compute_dtype)
    acc[...] += jnp.dot(x_ref[...].astype(compute_dtype), w,
                        preferred_element_type=jnp.float32)

    @pl.when(k == pl.num_programs(k_axis) - 1)
    def _():
        o_ref[...] = jnp.maximum(acc[...] + b_ref[...], 0.0).astype(o_ref.dtype)


# --------------------------------------------------------------------------
# Host-side packing / tile selection
# --------------------------------------------------------------------------
def prepare_weight(weight_nk, compute_dtype=jnp.bfloat16):
    """One-time (model-load) packing: PyTorch (N, K) -> (K, N), narrow dtype.

    Storing the weight pre-transposed and in the MXU compute dtype halves (or
    quarters) the per-call weight HBM traffic, which dominates this kernel.
    """
    return jnp.asarray(weight_nk).T.astype(compute_dtype)


def _vmem_limit_bytes():
    try:
        cap = pltpu.get_tpu_info().vmem_capacity_bytes
    except Exception:
        cap = 64 * 1024 * 1024  # conservative (v7x physical) if query fails
    # ~75% of physical VMEM, capped, with a 32 MiB floor.
    return max(32 * 1024 * 1024, min(int(cap * 0.75), 100 * 1024 * 1024))


def _divisor_candidates(dim, cands):
    out = {c for c in cands if c <= dim and dim % c == 0}
    out.add(dim)  # full extent is always a legal block extent
    return sorted(out, reverse=True)


def _pick_tile_b(B):
    if B <= 256:
        return B
    for c in (256, 128):  # MXU-friendly M tiles
        if B % c == 0:
            return c
    return B


def _select_tiles(resident_b, N, K, x_bytes, w_bytes, out_bytes, acc_in_out,
                  budget, tile_n=None, tile_k=None):
    n_cands = [tile_n] if tile_n else _divisor_candidates(N, (512, 256, 128))
    k_cands = [tile_k] if tile_k else _divisor_candidates(
        K, (2048, 1024, 512, 256, 128))

    def need(tn, tk):
        return (2 * resident_b * tk * x_bytes        # x double-buffer
                + 2 * tk * tn * w_bytes              # weight double-buffer
                + 2 * resident_b * tn * out_bytes    # output double-buffer
                + (0 if acc_in_out else resident_b * tn * 4))  # f32 accumulator

    fitting = [(tn, tk) for tn in n_cands for tk in k_cands
               if need(tn, tk) <= budget]
    if fitting:
        # Prefer the fattest K-tile (longer weight DMAs, fewer grid steps),
        # then the widest lane-dense N-tile.
        return max(fitting, key=lambda p: (p[1], p[0]))
    # Nothing fits the budget: fall back to the smallest footprint.
    return min(((tn, tk) for tn in n_cands for tk in k_cands),
               key=lambda p: need(p[0], p[1]))


# --------------------------------------------------------------------------
# Wrapper
# --------------------------------------------------------------------------
def fully_connected(x, w_kn, bias=None, gamma=None, beta=None, *,
                    batch_norm=True, compute_dtype=jnp.bfloat16,
                    tile_n=None, tile_k=None, tile_b=None):
    """x: (B, K); w_kn: pre-packed weight (K, N) from prepare_weight();
    bias/gamma/beta: (N,)."""
    B, K = x.shape
    K2, N = w_kn.shape
    assert K == K2, f"packed weight must be (K, N); got {w_kn.shape} for K={K}"

    out_dtype = x.dtype
    acc_in_out = (out_dtype == jnp.float32)

    vmem_limit = _vmem_limit_bytes()
    budget = int(vmem_limit * 0.8)

    x_bytes = x.dtype.itemsize
    w_bytes = w_kn.dtype.itemsize
    out_bytes = jnp.dtype(out_dtype).itemsize

    if batch_norm:
        assert gamma is not None and beta is not None
        # Whole batch stays resident per feature tile (batch-stat epilogue).
        tile_n, tile_k = _select_tiles(B, N, K, x_bytes, w_bytes, out_bytes,
                                       acc_in_out, budget, tile_n, tile_k)
        assert N % tile_n == 0 and K % tile_k == 0

        grid = (N // tile_n, K // tile_k)
        in_specs = [
            pl.BlockSpec((B, tile_k), lambda j, k: (0, k)),
            pl.BlockSpec((tile_k, tile_n), lambda j, k: (k, j)),
            pl.BlockSpec((1, tile_n), lambda j, k: (0, j)),
            pl.BlockSpec((1, tile_n), lambda j, k: (0, j)),
        ]
        out_spec = pl.BlockSpec((B, tile_n), lambda j, k: (0, j))
        scratch = [] if acc_in_out else [pltpu.VMEM((B, tile_n), jnp.float32)]
        kernel = functools.partial(_fc_bn_relu_kernel,
                                   compute_dtype=compute_dtype, k_axis=1)
        dims = ("parallel", "arbitrary")
        args = (x, w_kn,
                gamma.reshape(1, N).astype(jnp.float32),
                beta.reshape(1, N).astype(jnp.float32))
    else:
        assert bias is not None
        if tile_b is None:
            tile_b = _pick_tile_b(B)
        assert B % tile_b == 0
        tile_n, tile_k = _select_tiles(tile_b, N, K, x_bytes, w_bytes,
                                       out_bytes, acc_in_out, budget,
                                       tile_n, tile_k)
        assert N % tile_n == 0 and K % tile_k == 0

        grid = (B // tile_b, N // tile_n, K // tile_k)
        in_specs = [
            pl.BlockSpec((tile_b, tile_k), lambda b, j, k: (b, k)),
            pl.BlockSpec((tile_k, tile_n), lambda b, j, k: (k, j)),
            pl.BlockSpec((1, tile_n), lambda b, j, k: (0, j)),
        ]
        out_spec = pl.BlockSpec((tile_b, tile_n), lambda b, j, k: (b, j))
        scratch = [] if acc_in_out else [pltpu.VMEM((tile_b, tile_n),
                                                    jnp.float32)]
        kernel = functools.partial(_fc_relu_kernel,
                                   compute_dtype=compute_dtype, k_axis=2)
        dims = ("parallel", "parallel", "arbitrary")
        args = (x, w_kn, bias.reshape(1, N).astype(jnp.float32))

    grid_spec = pltpu.PrefetchScalarGridSpec(
        num_scalar_prefetch=0,
        grid=grid,
        in_specs=in_specs,
        out_specs=out_spec,
        scratch_shapes=scratch,
    )
    return pl.pallas_call(
        kernel,
        out_shape=jax.ShapeDtypeStruct((B, N), out_dtype),
        grid_spec=grid_spec,
        compiler_params=pltpu.CompilerParams(
            dimension_semantics=dims,
            vmem_limit_bytes=vmem_limit,
        ),
    )(*args)


# --------------------------------------------------------------------------
# Reference + test
# --------------------------------------------------------------------------
def reference(x, weight, bias, gamma, beta, batch_norm=True):
    y = x @ weight.T + bias
    if batch_norm:
        mean = y.mean(axis=0, keepdims=True)
        var = ((y - mean) ** 2).mean(axis=0, keepdims=True)
        y = (y - mean) / jnp.sqrt(var + EPS) * gamma + beta
    return jnp.maximum(y, 0.0)


if __name__ == "__main__":
    key = jax.random.PRNGKey(0)
    B, K, N = 8, 32, 256  # batch, inputElements, outputElements

    kx, kw, kb = jax.random.split(key, 3)
    x = jax.random.normal(kx, (B, K), dtype=jnp.float32)

    # Deterministic parameter init (mimicking nn.Linear's uniform fan-in init).
    bound = 1.0 / np.sqrt(K)
    weight = jax.random.uniform(kw, (N, K), minval=-bound, maxval=bound,
                                dtype=jnp.float32)
    bias = jax.random.uniform(kb, (N,), minval=-bound, maxval=bound,
                              dtype=jnp.float32)
    gamma = jnp.ones((N,), dtype=jnp.float32)   # BatchNorm1d default affine init
    beta = jnp.zeros((N,), dtype=jnp.float32)

    ref = reference(x, weight, bias, gamma, beta)

    # Exact-precision path: f32-packed weights, f32 MXU inputs.
    w_f32 = prepare_weight(weight, jnp.float32)
    out_f32 = jax.block_until_ready(
        fully_connected(x, w_f32, gamma=gamma, beta=beta,
                        compute_dtype=jnp.float32))
    np.testing.assert_allclose(np.asarray(out_f32), np.asarray(ref),
                               rtol=1e-5, atol=1e-5)

    # Fast path: bf16-packed weights (one-time model-load cast => half the
    # weight HBM bytes per call), f32 accumulate + f32 BN/ReLU epilogue.
    w_bf16 = prepare_weight(weight, jnp.bfloat16)
    out_bf16 = jax.block_until_ready(
        fully_connected(x, w_bf16, gamma=gamma, beta=beta,
                        compute_dtype=jnp.bfloat16))
    np.testing.assert_allclose(np.asarray(out_bf16), np.asarray(ref),
                               rtol=5e-2, atol=5e-2)

    # batchNorm=False branch of the module (Linear + bias -> ReLU), B-tiled.
    out_nobn = jax.block_until_ready(
        fully_connected(x, w_f32, bias=bias, batch_norm=False,
                        compute_dtype=jnp.float32))
    ref_nobn = reference(x, weight, bias, gamma, beta, batch_norm=False)
    np.testing.assert_allclose(np.asarray(out_nobn), np.asarray(ref_nobn),
                               rtol=1e-5, atol=1e-5)

    print("KERNEL_OK")
</pallas_src>

<mosaic_0001>
module attributes {stable_mosaic.version = 11 : i64} {
  func.func @_fc_bn_relu_kernel(%arg0: i32, %arg1: i32, %arg2: memref<8x32xf32, #tpu.memory_space<vmem>>, %arg3: memref<32x256xf32, #tpu.memory_space<vmem>>, %arg4: memref<1x256xf32, #tpu.memory_space<vmem>>, %arg5: memref<1x256xf32, #tpu.memory_space<vmem>>, %arg6: memref<8x256xf32, #tpu.memory_space<vmem>>) attributes {dimension_semantics = [#tpu.dimension_semantics<parallel>, #tpu.dimension_semantics<arbitrary>], iteration_bounds = array<i64: 1, 1>, scalar_prefetch = 0 : i64, scratch_operands = 0 : i64, tpu.core_type = #tpu.core_type<tc>, window_params = [{transform_indices = @transform_0, window_bounds = array<i64: 8, 32>}, {transform_indices = @transform_1, window_bounds = array<i64: 32, 256>}, {transform_indices = @transform_2, window_bounds = array<i64: 1, 256>}, {transform_indices = @transform_3, window_bounds = array<i64: 1, 256>}, {transform_indices = @transform_4, window_bounds = array<i64: 8, 256>}]} {
    %c0_i32 = arith.constant 0 : i32
    %0 = arith.cmpi eq, %arg1, %c0_i32 : i32
    %1 = arith.extui %0 : i1 to i32
    %c0_i32_0 = arith.constant 0 : i32
    %2 = arith.cmpi ne, %1, %c0_i32_0 : i32
    scf.if %2 {
      %cst_10 = arith.constant 0.000000e+00 : f32
      %12 = vector.broadcast %cst_10 : f32 to vector<8x256xf32>
      %c0_11 = arith.constant 0 : index
      %c0_12 = arith.constant 0 : index
      %13 = vector.load %arg6[%c0_11, %c0_12] : memref<8x256xf32, #tpu.memory_space<vmem>>, vector<8x256xf32>
      tpu.vector_store %arg6[%c0_11, %c0_12], %12 {strides = array<i32>} : memref<8x256xf32, #tpu.memory_space<vmem>>, vector<8x256xf32>,
    } else {
    }
    %c0 = arith.constant 0 : index
    %c0_1 = arith.constant 0 : index
    %3 = vector.load %arg3[%c0, %c0_1] : memref<32x256xf32, #tpu.memory_space<vmem>>, vector<32x256xf32>
    %c0_2 = arith.constant 0 : index
    %c0_3 = arith.constant 0 : index
    %4 = vector.load %arg6[%c0_2, %c0_3] : memref<8x256xf32, #tpu.memory_space<vmem>>, vector<8x256xf32>
    %c0_4 = arith.constant 0 : index
    %c0_5 = arith.constant 0 : index
    %5 = vector.load %arg2[%c0_4, %c0_5] : memref<8x32xf32, #tpu.memory_space<vmem>>, vector<8x32xf32>
    %cst = arith.constant dense<0.000000e+00> : vector<8x256xf32>
    %6 = tpu.matmul %5, %3, %cst {dimension_numbers = #tpu.dot_dimension_numbers<[1], [0], [0], [1], [0, 0, 1, 1], [], []>} : vector<8x32xf32>, vector<32x256xf32>, vector<8x256xf32> -> vector<8x256xf32>
    %7 = arith.addf %4, %6 : vector<8x256xf32>
    %c0_6 = arith.constant 0 : index
    %c0_7 = arith.constant 0 : index
    %8 = vector.load %arg6[%c0_6, %c0_7] : memref<8x256xf32, #tpu.memory_space<vmem>>, vector<8x256xf32>
    tpu.vector_store %arg6[%c0_6, %c0_7], %7 {strides = array<i32>} : memref<8x256xf32, #tpu.memory_space<vmem>>, vector<8x256xf32>,
    %c0_i32_8 = arith.constant 0 : i32
    %9 = arith.cmpi eq, %arg1, %c0_i32_8 : i32
    %10 = arith.extui %9 : i1 to i32
    %c0_i32_9 = arith.constant 0 : i32
    %11 = arith.cmpi ne, %10, %c0_i32_9 : i32
    scf.if %11 {
      %c0_10 = arith.constant 0 : index
      %c0_11 = arith.constant 0 : index
      %12 = vector.load %arg6[%c0_10, %c0_11] : memref<8x256xf32, #tpu.memory_space<vmem>>, vector<8x256xf32>
      %cst_12 = arith.constant dense<0.000000e+00> : vector<256xf32>
      %13 = vector.multi_reduction <add>, %12, %cst_12 [0] : vector<8x256xf32> to vector<256xf32>
      %14 = vector.shape_cast %13 : vector<256xf32> to vector<1x256xf32>
      %cst_13 = arith.constant 8.000000e+00 : f32
      %15 = vector.broadcast %cst_13 : f32 to vector<1x256xf32>
      %16 = arith.divf %14, %15 : vector<1x256xf32>
      %17 = vector.broadcast %16 : vector<1x256xf32> to vector<8x256xf32>
      %18 = arith.subf %12, %17 : vector<8x256xf32>
      %19 = arith.mulf %18, %18 : vector<8x256xf32>
      %cst_14 = arith.constant dense<0.000000e+00> : vector<256xf32>
      %20 = vector.multi_reduction <add>, %19, %cst_14 [0] : vector<8x256xf32> to vector<256xf32>
      %21 = vector.shape_cast %20 : vector<256xf32> to vector<1x256xf32>
      %cst_15 = arith.constant 8.000000e+00 : f32
      %22 = vector.broadcast %cst_15 : f32 to vector<1x256xf32>
      %23 = arith.divf %21, %22 : vector<1x256xf32>
      %cst_16 = arith.constant 9.99999974E-6 : f32
      %24 = vector.broadcast %cst_16 : f32 to vector<1x256xf32>
      %25 = arith.addf %23, %24 : vector<1x256xf32>
      %26 = math.rsqrt %25 : vector<1x256xf32>
      %c0_17 = arith.constant 0 : index
      %c0_18 = arith.constant 0 : index
      %27 = vector.load %arg4[%c0_17, %c0_18] : memref<1x256xf32, #tpu.memory_space<vmem>>, vector<1x256xf32>
      %28 = arith.mulf %26, %27 : vector<1x256xf32>
      %29 = vector.broadcast %28 : vector<1x256xf32> to vector<8x256xf32>
      %30 = arith.mulf %18, %29 : vector<8x256xf32>
      %c0_19 = arith.constant 0 : index
      %c0_20 = arith.constant 0 : index
      %31 = vector.load %arg5[%c0_19, %c0_20] : memref<1x256xf32, #tpu.memory_space<vmem>>, vector<1x256xf32>
      %32 = vector.broadcast %31 : vector<1x256xf32> to vector<8x256xf32>
      %33 = arith.addf %30, %32 : vector<8x256xf32>
      %cst_21 = arith.constant 0.000000e+00 : f32
      %34 = vector.broadcast %cst_21 : f32 to vector<8x256xf32>
      %35 = arith.maximumf %33, %34 : vector<8x256xf32>
      %c0_22 = arith.constant 0 : index
      %c0_23 = arith.constant 0 : index
      %36 = vector.load %arg6[%c0_22, %c0_23] : memref<8x256xf32, #tpu.memory_space<vmem>>, vector<8x256xf32>
      tpu.vector_store %arg6[%c0_22, %c0_23], %35 {strides = array<i32>} : memref<8x256xf32, #tpu.memory_space<vmem>>, vector<8x256xf32>,
    } else {
    }
    return
  }
  func.func @transform_0(%arg0: i32, %arg1: i32) -> (i32, i32) {
    %c0_i32 = arith.constant 0 : i32
    %c0_i32_0 = arith.constant 0 : i32
    return %c0_i32, %arg1 : i32, i32
  }
  func.func @transform_1(%arg0: i32, %arg1: i32) -> (i32, i32) {
    %c0_i32 = arith.constant 0 : i32
    return %arg1, %arg0 : i32, i32
  }
  func.func @transform_2(%arg0: i32, %arg1: i32) -> (i32, i32) {
    %c0_i32 = arith.constant 0 : i32
    %c0_i32_0 = arith.constant 0 : i32
    return %c0_i32, %arg0 : i32, i32
  }
  func.func @transform_3(%arg0: i32, %arg1: i32) -> (i32, i32) {
    %c0_i32 = arith.constant 0 : i32
    %c0_i32_0 = arith.constant 0 : i32
    return %c0_i32, %arg0 : i32, i32
  }
  func.func @transform_4(%arg0: i32, %arg1: i32) -> (i32, i32) {
    %c0_i32 = arith.constant 0 : i32
    %c0_i32_0 = arith.constant 0 : i32
    return %c0_i32, %arg0 : i32, i32
  }
}

</mosaic_0001>

<llo_original>
// kernel: tpu_custom_call.1
$region0: #{tpu_custom_call.1}
  #allocation0 [shape = 'u32[]', space=smem, size = 0x4, offset = 0x4, fixed_abs, tag = 'smem constant byte address 0x4 - core index']
  #allocation1 [shape = 'u32[72,128]{1,0:T(1,128)}', space=vmem, size = 0x9000, scoped, tag = 'internal scratch']
  %s0 = inlined_call_operand.hbm [shape: f32[8,32], index: 0, kind: input, shape index: {}]
  %s1 = inlined_call_operand.hbm [shape: f32[32,256], index: 1, kind: input, shape index: {}]
  %s2 = inlined_call_operand.hbm [shape: f32[1,256], index: 2, kind: input, shape index: {}]
  %s3 = inlined_call_operand.vmem [shape: f32[1,256], index: 3, kind: input, shape index: {}]
  %s4 = inlined_call_operand.hbm [shape: f32[8,256], index: 4, kind: output, shape index: {}]
  %s5 = sld [smem:[#allocation0]]
  $region46: #{tpu_custom_call.1} parent=0
    _
  %s7 = ssub.s32 1, %s5
  %s8 = scalar_select 0, %s7, %s5
  $region1: #{tpu_custom_call.1} parent=0
    #allocation2 [shape = 'u8[4096]{0}', space=vmem, size = 0x1000, scoped, tag = 'input window, operand 0, single buffered']
    #allocation3 [shape = 's32[1]{0}', space=sflag, size = 0x4, scoped, tag = 'scoped memory for tpu_custom_call.1']
    #allocation4 [shape = 's32[1]{0}', space=sflag, size = 0x4, scoped, tag = 'scoped memory for tpu_custom_call.1']
    #allocation5 [shape = 'u8[32768]{0}', space=vmem, size = 0x8000, scoped, tag = 'input window, operand 1, single buffered']
    #allocation6 [shape = 's32[1]{0}', space=sflag, size = 0x4, scoped, tag = 'scoped memory for tpu_custom_call.1']
    #allocation7 [shape = 'u8[1024]{0}', space=vmem, size = 0x400, scoped, tag = 'input window, operand 2, single buffered']
    #allocation8 [shape = 'u8[8192]{0}', space=vmem, size = 0x2000, scoped, tag = 'output window, operand 0, single buffered']
    %9 = vsyncpa [#allocation3], 0
    %10 = vsyncpa [#allocation6], 0
    %11 = vsyncpa [#allocation4], 0
    // Predicated region
    $region2: #{tpu_custom_call.1} parent=1 // pred_check
      _
    $region3: #{tpu_custom_call.1} parent=1 // pred_check_branch
      %13 = sbr.rel (0) target = $region5
    $region4: #{tpu_custom_call.1} parent=1 // pred_region
      %15 = vsyncadd [#allocation3], 0
      %s17 = sshll.u32 %s0, 4
      %s18 = int_to_ptr.hbm [resolvable:$true] %s17
      %s19 = sshll.u32 [#allocation2], 4
      %s20 = int_to_ptr.vmem [resolvable:$true] %s19
      %22 = dma.hbm_to_vmem [thread:$0]  %s18, 128, %s20, [#allocation3]
    $region5: #{tpu_custom_call.1} parent=1 // pred_fallthru
      _
    // Predicated region
    $region6: #{tpu_custom_call.1} parent=1 // pred_check
      _
    $region7: #{tpu_custom_call.1} parent=1 // pred_check_branch
      %24 = sbr.rel (0) target = $region9
    $region8: #{tpu_custom_call.1} parent=1 // pred_region
      %26 = vsyncadd [#allocation6], 0
      %s27 = sshll.u32 %s1, 4
      %s28 = int_to_ptr.hbm [resolvable:$true] %s27
      %s29 = sshll.u32 [#allocation5], 4
      %s30 = int_to_ptr.vmem [resolvable:$true] %s29
      %35 = dma.hbm_to_vmem [thread:$0]  %s28, 1024, %s30, [#allocation6], 256, 256, 16
    $region9: #{tpu_custom_call.1} parent=1 // pred_fallthru
      _
    // Predicated region
    $region10: #{tpu_custom_call.1} parent=1 // pred_check
      _
    $region11: #{tpu_custom_call.1} parent=1 // pred_check_branch
      %37 = sbr.rel (0) target = $region13
    $region12: #{tpu_custom_call.1} parent=1 // pred_region
      %39 = vsyncadd [#allocation6], 0
      %s41 = sshll.u32 %s2, 4
      %s42 = int_to_ptr.hbm [resolvable:$true] %s41
      %s43 = sshll.u32 [#allocation7], 4
      %s44 = int_to_ptr.vmem [resolvable:$true] %s43
      %46 = dma.hbm_to_vmem [thread:$0]  %s42, 32, %s44, [#allocation6]
    $region13: #{tpu_custom_call.1} parent=1 // pred_fallthru
      _
    // Predicated region
    $region14: #{tpu_custom_call.1} parent=1 // pred_check
      _
    $region15: #{tpu_custom_call.1} parent=1 // pred_check_branch
      %48 = sbr.rel (0) target = $region17
    $region16: #{tpu_custom_call.1} parent=1 // pred_region
      _
    $region17: #{tpu_custom_call.1} parent=1 // pred_fallthru
      _
    // Predicated region
    $region18: #{tpu_custom_call.1} parent=1 // pred_check
      _
    $region19: #{tpu_custom_call.1} parent=1 // pred_check_branch
      %50 = sbr.rel (0) target = $region21
    $region20: #{tpu_custom_call.1} parent=1 // pred_region
      %52 = dma.done [#allocation3], 128
    $region21: #{tpu_custom_call.1} parent=1 // pred_fallthru
      _
    // Predicated region
    $region22: #{tpu_custom_call.1} parent=1 // pred_check
      _
    $region23: #{tpu_custom_call.1} parent=1 // pred_check_branch
      %54 = sbr.rel (0) target = $region25
    $region24: #{tpu_custom_call.1} parent=1 // pred_region
      %56 = dma.done [#allocation6], 1024
    $region25: #{tpu_custom_call.1} parent=1 // pred_fallthru
      _
    // Predicated region
    $region26: #{tpu_custom_call.1} parent=1 // pred_check
      _
    $region27: #{tpu_custom_call.1} parent=1 // pred_check_branch
      %58 = sbr.rel (0) target = $region29
    $region28: #{tpu_custom_call.1} parent=1 // pred_region
      %60 = dma.done [#allocation6], 32
    $region29: #{tpu_custom_call.1} parent=1 // pred_fallthru
      _
    %p61 = scmp.eq.s32.totalorder 0, 0
    // Predicated region
    $region30: #{tpu_custom_call.1} parent=1 // pred_check
      %p62 = pneg %p61
    $region31: #{tpu_custom_call.1} parent=1 // pred_check_branch
      %64 = sbr.rel (%p62) target = $region33
    $region32: #{tpu_custom_call.1} parent=1 // pred_region
      %65 = vst [vmem:[#allocation8] sm:$0xff] 0.0
      %66 = vst [vmem:[#allocation8 + $0x8] sm:$0xff] 0.0
    $region33: #{tpu_custom_call.1} parent=1 // pred_fallthru
      _
    %v67 = vld [vmem:[#allocation5] sm:$0xff]
    %v68 = vld [vmem:[#allocation5 + $0x8] sm:$0xff]
    %v69 = vld [vmem:[#allocation5 + $0x10] sm:$0xff]
    %v70 = vld [vmem:[#allocation5 + $0x18] sm:$0xff]
    %v71 = vld [vmem:[#allocation5 + $0x20] sm:$0xff]
    %v72 = vld [vmem:[#allocation5 + $0x28] sm:$0xff]
    %v73 = vld [vmem:[#allocation5 + $0x30] sm:$0xff]
    %v74 = vld [vmem:[#allocation5 + $0x38] sm:$0xff]
    %v75 = vld [vmem:[#allocation8] sm:$0xff]
    %v76 = vld [vmem:[#allocation8 + $0x8] sm:$0xff]
    %v77 = vld [vmem:[#allocation2] sm:$0xff]
    %vm78 = vcmask 261120
    %v80 = vsel %vm78, %v77, 0
    %82 = vmatpush.msra.mxu0 0.0
    %83 = vmatpush.msra.mxu0 0.0
    %84 = vmatpush.msra.mxu0 0.0
    %85 = vmatpush.msra.mxu0 0.0
    %86 = vmatpush.msra.mxu0 0.0
    %87 = vmatpush.msra.mxu0 0.0
    %88 = vmatpush.msra.mxu0 0.0
    %89 = vmatpush.msra.mxu0 0.0
    %90 = vmatpush.msra.mxu0 0.0
    %91 = vmatpush.msra.mxu0 0.0
    %92 = vmatpush.msra.mxu0 0.0
    %93 = vmatpush.msra.mxu0 0.0
    %94 = vmatpush.msra.mxu0 %v73
    %95 = vmatpush.msra.mxu0 %v71
    %96 = vmatpush.msra.mxu0 %v69
    %97 = vmatpush.msra.mxu0 %v67
    %98 = vmatmul.f32.gmra.mxu0 %v80
    %v99 = vpop.f32.mrf.mxu0
    %v100 = vadd.f32 0.0, %v99
    %101 = vdwg.mxu0
    %102 = vmatpush.msra.mxu0 0.0
    %103 = vmatpush.msra.mxu0 0.0
    %104 = vmatpush.msra.mxu0 0.0
    %105 = vmatpush.msra.mxu0 0.0
    %106 = vmatpush.msra.mxu0 0.0
    %107 = vmatpush.msra.mxu0 0.0
    %108 = vmatpush.msra.mxu0 0.0
    %109 = vmatpush.msra.mxu0 0.0
    %110 = vmatpush.msra.mxu0 0.0
    %111 = vmatpush.msra.mxu0 0.0
    %112 = vmatpush.msra.mxu0 0.0
    %113 = vmatpush.msra.mxu0 0.0
    %114 = vmatpush.msra.mxu0 %v74
    %115 = vmatpush.msra.mxu0 %v72
    %116 = vmatpush.msra.mxu0 %v70
    %117 = vmatpush.msra.mxu0 %v68
    %118 = vmatmul.f32.gmra.mxu0 %v80
    %v119 = vpop.f32.mrf.mxu0
    %v120 = vadd.f32 0.0, %v119
    %121 = vdwg.mxu0
    %v122 = vadd.f32 %v75, %v100
    %v123 = vadd.f32 %v76, %v120
    %124 = vst [vmem:[#allocation8] sm:$0xff] %v122
    %125 = vst [vmem:[#allocation8 + $0x8] sm:$0xff] %v123
    // Predicated region
    $region34: #{tpu_custom_call.1} parent=1 // pred_check
      %p126 = pneg %p61
    $region35: #{tpu_custom_call.1} parent=1 // pred_check_branch
      %128 = sbr.rel (%p126) target = $region37
    $region36: #{tpu_custom_call.1} parent=1 // pred_region
      %v129 = vld [vmem:[#allocation8] sm:$0xff]
      %v130 = vld [vmem:[#allocation8 + $0x8] sm:$0xff]
      %v131 = vrot.slane %v129, 4
      %v132 = vadd.f32 %v129, %v131
      %v133 = vrot.slane %v132, 2
      %v134 = vadd.f32 %v132, %v133
      %v135 = vrot.slane %v134, 1
      %v136 = vadd.f32 %v134, %v135
      %v137 = vrot.slane %v130, 4
      %v138 = vadd.f32 %v130, %v137
      %v139 = vrot.slane %v138, 2
      %v140 = vadd.f32 %v138, %v139
      %v141 = vrot.slane %v140, 1
      %v142 = vadd.f32 %v140, %v141
      %v143 = vrcp.pop 8.0
      %v144 = vmul.f32 8.0, %v143
      %v145 = vsub.f32 1.0, %v144
      %v146 = vmul.f32 %v143, %v145
      %v147 = vadd.f32 %v143, %v146
      %vm148 = vweird.f32 %v143
      %v149 = vsel %vm148, %v143, %v147
      %v150 = vmul.f32 %v136, %v149
      %v151 = vmul.f32 %v142, %v149
      %v152 = vsub.f32 %v129, %v150
      %v153 = vsub.f32 %v130, %v151
      %v154 = vmul.f32 %v152, %v152
      %v155 = vmul.f32 %v153, %v153
      %v156 = vrot.slane %v154, 4
      %v157 = vadd.f32 %v154, %v156
      %v158 = vrot.slane %v157, 2
      %v159 = vadd.f32 %v157, %v158
      %v160 = vrot.slane %v159, 1
      %v161 = vadd.f32 %v159, %v160
      %v162 = vrot.slane %v155, 4
      %v163 = vadd.f32 %v155, %v162
      %v164 = vrot.slane %v163, 2
      %v165 = vadd.f32 %v163, %v164
      %v166 = vrot.slane %v165, 1
      %v167 = vadd.f32 %v165, %v166
      %v168 = vmul.f32 %v161, %v149
      %v169 = vmul.f32 %v167, %v149
      %v170 = vadd.f32 %v168, 1e-05
      %v171 = vadd.f32 %v169, 1e-05
      %v172 = vrsqrt.pop %v170
      %v173 = vmul.f32 %v172, %v170
      %v174 = vmul.f32 %v173, %v172
      %v175 = vmul.f32 0.5, %v174
      %v176 = vsub.f32 1.5, %v175
      %v177 = vmul.f32 %v172, %v176
      %vm178 = vweird.f32 %v170
      %vm179 = vweird.f32 %v172
      %vm180 = vmor %vm178, %vm179
      %v181 = vsel %vm180, %v172, %v177
      %v182 = vrsqrt.pop %v171
      %v183 = vmul.f32 %v182, %v171
      %v184 = vmul.f32 %v183, %v182
      %v185 = vmul.f32 0.5, %v184
      %v186 = vsub.f32 1.5, %v185
      %v187 = vmul.f32 %v182, %v186
      %vm188 = vweird.f32 %v171
      %vm189 = vweird.f32 %v182
      %vm190 = vmor %vm188, %vm189
      %v191 = vsel %vm190, %v182, %v187
      %v192 = vld [vmem:[#allocation7] sm:$0x3]
      %v194 = vperm.slane %v192, 0
      %v195 = vperm.slane %v192, 1
      %v198 = vmul.f32 %v181, %v194
      %v199 = vmul.f32 %v191, %v195
      %v200 = vperm.slane %v198, 0
      %v201 = vperm.slane %v199, 0
      %v202 = vmul.f32 %v152, %v200
      %v203 = vmul.f32 %v153, %v201
      %v204 = vld [vmem:[%s3] sm:$0x3]
      %v206 = vperm.slane %v204, 0
      %v207 = vperm.slane %v204, 1
      %v210 = vadd.f32 %v202, %v206
      %v211 = vadd.f32 %v203, %v207
      %v212 = vmax.f32 %v210, 0.0
      %v213 = vmax.f32 %v211, 0.0
      %214 = vst [vmem:[#allocation8] sm:$0xff] %v212
      %215 = vst [vmem:[#allocation8 + $0x8] sm:$0xff] %v213
    $region37: #{tpu_custom_call.1} parent=1 // pred_fallthru
      _
    // Predicated region
    $region38: #{tpu_custom_call.1} parent=1 // pred_check
      _
    $region39: #{tpu_custom_call.1} parent=1 // pred_check_branch
      %217 = sbr.rel (0) target = $region41
    $region40: #{tpu_custom_call.1} parent=1 // pred_region
      %219 = vsyncadd [#allocation4], 0
      %s221 = sshll.u32 [#allocation8], 4
      %s222 = int_to_ptr.vmem [resolvable:$true] %s221
      %s223 = sshll.u32 %s4, 4
      %s224 = int_to_ptr.hbm [resolvable:$true] %s223
      %226 = dma.vmem_to_hbm [thread:$0]  %s222, 256, %s224, [#allocation4]
    $region41: #{tpu_custom_call.1} parent=1 // pred_fallthru
      _
    // Predicated region
    $region42: #{tpu_custom_call.1} parent=1 // pred_check
      _
    $region43: #{tpu_custom_call.1} parent=1 // pred_check_branch
      %228 = sbr.rel (0) target = $region45
    $region44: #{tpu_custom_call.1} parent=1 // pred_region
      %230 = dma.done [#allocation4], 256
    $region45: #{tpu_custom_call.1} parent=1 // pred_fallthru
      _
    %231 = vsyncpa [#allocation3], 1
    %232 = vsyncpa [#allocation6], 1
    %233 = vsyncpa [#allocation4], 1

</llo_original>
